<compile_context>
chip_gen: v5e
topology: v5e:2x2
jax: 0.10.0
libtpu: 0.0.40
codegen_flags: <defaults>
</compile_context>

<pallas_src>
import functools

import jax
import jax.numpy as jnp
from jax.experimental import pallas as pl
from jax.experimental.pallas import tpu as pltpu

_LANES = 128
_SUBLANES = 8
_MAX_TILE_ROWS = 4096            # (4096, 128) f32 = 2 MiB per input per block
_SPLIT_MIN_ROWS = 64             # force >=2 grid blocks above this (v7x dual-TC)
_VMEM_LIMIT_BYTES = 32 * 1024 * 1024


def _round_up(x, m):
    return ((x + m - 1) // m) * m


def _sublane_multiple(*dtypes):
    """Smallest row multiple satisfying the (sublane, 128) tiling minimum."""
    m = _SUBLANES                      # f32: (8, 128)
    for dt in dtypes:
        m = max(m, 32 // max(1, jnp.dtype(dt).itemsize))  # bf16: 16, int8/fp8: 32
    return m


def _huber_elementwise(yt, yp, delta, penalty_weight):
    """Folded Huber-with-penalty (f32 in / f32 out). Also used in-kernel."""
    r = jnp.abs(yt - yp)
    cond = r < delta
    # r <  delta:  r * 0.5r - 0              = 0.5 * r^2
    # r >= delta:  r * pw   - 0.5*delta*pw   = pw * (r - 0.5*delta)
    return (r * jnp.where(cond, 0.5 * r, penalty_weight)
            - jnp.where(cond, 0.0, 0.5 * delta * penalty_weight))


def _huber_pena_kernel(yt_ref, yp_ref, out_ref, *, delta, penalty_weight,
                       tile_rows, rows_last, grid_n):
    yt = yt_ref[...].astype(jnp.float32)
    yp = yp_ref[...].astype(jnp.float32)
    loss = _huber_elementwise(yt, yp, delta, penalty_weight)

    def _partial(x):
        # VPU-only partial sum: (tile_rows, 128) -> lane-dense (8, 128).
        return jnp.sum(x.reshape(tile_rows // _SUBLANES, _SUBLANES, _LANES),
                       axis=0)

    if rows_last == tile_rows:
        # Every block is full: no mask anywhere.
        out_ref[...] = _partial(loss)
    elif grid_n == 1:
        # Single, partial block: masked partial sum only (rows_last is static).
        row_ids = jax.lax.broadcasted_iota(jnp.int32, (tile_rows, _LANES), 0)
        out_ref[...] = _partial(jnp.where(row_ids < rows_last, loss, 0.0))
    else:
        # Steady state: unmasked. Only the last block redoes the partial sum
        # with a block-local row mask (zeros out the OOB rows of the last tile).
        out_ref[...] = _partial(loss)

        @pl.when(pl.program_id(0) == grid_n - 1)
        def _():
            row_ids = jax.lax.broadcasted_iota(jnp.int32, (tile_rows, _LANES), 0)
            out_ref[...] = _partial(jnp.where(row_ids < rows_last, loss, 0.0))


def _huber_pena_reference(y_true, y_pred, delta=1.0, penalty_weight=1.0):
    """Pure-jnp reference (original, unfolded formula)."""
    yt = y_true.astype(jnp.float32)
    yp = y_pred.astype(jnp.float32)
    r = jnp.abs(yt - yp)
    loss = jnp.where(r < delta, 0.5 * r * r, penalty_weight * (r - 0.5 * delta))
    return jnp.mean(loss)


def huber_loss_pena(y_true, y_pred, *, delta=1.0, penalty_weight=1.0,
                    min_kernel_elements=(1 << 18), force_kernel=False):
    assert y_true.shape == y_pred.shape
    n = int(y_true.size)
    delta = float(delta)
    penalty_weight = float(penalty_weight)

    if n == 0:
        return jnp.float32(jnp.nan)  # mean over empty tensor (matches torch.mean)

    # Small-N fallback: the pallas_call fixed overhead + separate wrapper reduce
    # dominate for tiny inputs, so use the pure-jnp path there.
    if (not force_kernel) and n < min_kernel_elements:
        return _huber_pena_reference(y_true, y_pred, delta, penalty_weight)

    yt = jnp.ravel(y_true)
    yp = jnp.ravel(y_pred)

    # Ragged sizes: compute the <128-element tail with plain jnp (no full-array
    # pad), and feed only whole 128-wide rows to the kernel.
    n_main = (n // _LANES) * _LANES
    tail_sum = jnp.float32(0.0)
    if n_main < n:
        tail_sum = jnp.sum(_huber_elementwise(
            yt[n_main:].astype(jnp.float32), yp[n_main:].astype(jnp.float32),
            delta, penalty_weight))
        if n_main == 0:
            return tail_sum / jnp.float32(n)
        yt = yt[:n_main]
        yp = yp[:n_main]

    rows = n_main // _LANES
    mult = _sublane_multiple(y_true.dtype, y_pred.dtype)
    rows_al = _round_up(rows, mult)
    if rows_al > _MAX_TILE_ROWS:
        tile_rows = _MAX_TILE_ROWS
    elif rows_al >= _SPLIT_MIN_ROWS:
        # Split into >= 2 blocks so a dual-TensorCore chip (v7x) keeps both
        # cores busy; costs one extra (negligible) grid step on v5e/v6e.
        tile_rows = _round_up(pl.cdiv(rows_al, 2), mult)
    else:
        tile_rows = rows_al
    grid_n = pl.cdiv(rows, tile_rows)
    rows_last = rows - (grid_n - 1) * tile_rows  # static rows in the last block

    yt2 = yt.reshape(rows, _LANES)
    yp2 = yp.reshape(rows, _LANES)

    kernel = functools.partial(
        _huber_pena_kernel,
        delta=delta,                      # Python floats: baked-in literals
        penalty_weight=penalty_weight,
        tile_rows=int(tile_rows),
        rows_last=int(rows_last),
        grid_n=int(grid_n),
    )

    out_bytes = grid_n * _SUBLANES * _LANES * 4
    cost = pl.CostEstimate(
        flops=8 * rows * _LANES,
        transcendentals=0,
        bytes_accessed=int(yt2.size * yt2.dtype.itemsize
                           + yp2.size * yp2.dtype.itemsize + out_bytes),
    )

    partials = pl.pallas_call(
        kernel,
        out_shape=jax.ShapeDtypeStruct((grid_n * _SUBLANES, _LANES),
                                       jnp.float32),
        grid_spec=pltpu.PrefetchScalarGridSpec(
            num_scalar_prefetch=0,
            grid=(grid_n,),
            in_specs=[
                pl.BlockSpec((tile_rows, _LANES), lambda i: (i, 0)),
                pl.BlockSpec((tile_rows, _LANES), lambda i: (i, 0)),
            ],
            out_specs=pl.BlockSpec((_SUBLANES, _LANES), lambda i: (i, 0)),
        ),
        compiler_params=pltpu.CompilerParams(
            dimension_semantics=("parallel",),
            vmem_limit_bytes=_VMEM_LIMIT_BYTES,
        ),
        cost_estimate=cost,
    )(yt2, yp2)

    # Tiny final reduction + mean normalization in the wrapper.
    return (jnp.sum(partials) + tail_sum) / jnp.float32(n)


if __name__ == "__main__":
    key = jax.random.PRNGKey(0)
    k1, k2, k3, k4, k5, k6 = jax.random.split(key, 6)

    # Case 1: small NCHW input (2048 elements, multiple of 128 -> zero-copy path).
    y_true = jax.random.normal(k1, (2, 4, 16, 16), dtype=jnp.float32)
    y_pred = jax.random.normal(k2, (2, 4, 16, 16), dtype=jnp.float32)
    out = huber_loss_pena(y_true, y_pred, delta=1.0, penalty_weight=1.0,
                          force_kernel=True)
    out = jax.block_until_ready(out)
    ref = _huber_pena_reference(y_true, y_pred, 1.0, 1.0)
    assert jnp.allclose(out, ref, rtol=1e-5, atol=1e-5), (out, ref)

    # Case 2: ragged size (1155 elements) -> kernel main part + jnp tail, with
    # the last-block row mask active.
    y_true2 = 2.0 * jax.random.normal(k3, (3, 5, 7, 11), dtype=jnp.float32)
    y_pred2 = 2.0 * jax.random.normal(k4, (3, 5, 7, 11), dtype=jnp.float32)
    out2 = huber_loss_pena(y_true2, y_pred2, delta=1.0, penalty_weight=2.0,
                           force_kernel=True)
    out2 = jax.block_until_ready(out2)
    ref2 = _huber_pena_reference(y_true2, y_pred2, 1.0, 2.0)
    assert jnp.allclose(out2, ref2, rtol=1e-5, atol=1e-5), (out2, ref2)

    # Case 3: medium size exercising the multi-block (grid_n >= 2), mask-free
    # steady-state path.
    y_true3 = jax.random.normal(k5, (4, 8, 64, 64), dtype=jnp.float32)
    y_pred3 = jax.random.normal(k6, (4, 8, 64, 64), dtype=jnp.float32)
    out3 = huber_loss_pena(y_true3, y_pred3, delta=0.5, penalty_weight=1.5,
                           force_kernel=True)
    out3 = jax.block_until_ready(out3)
    ref3 = _huber_pena_reference(y_true3, y_pred3, 0.5, 1.5)
    assert jnp.allclose(out3, ref3, rtol=1e-5, atol=1e-5), (out3, ref3)

    print("KERNEL_OK")
</pallas_src>

<mosaic_0001>
module attributes {stable_mosaic.version = 11 : i64} {
  func.func @_huber_pena_kernel(%arg0: i32, %arg1: memref<16x128xf32, #tpu.memory_space<vmem>>, %arg2: memref<16x128xf32, #tpu.memory_space<vmem>>, %arg3: memref<8x128xf32, #tpu.memory_space<vmem>>) attributes {dimension_semantics = [#tpu.dimension_semantics<parallel>], iteration_bounds = array<i64: 1>, scalar_prefetch = 0 : i64, scratch_operands = 0 : i64, tpu.core_type = #tpu.core_type<tc>, window_params = [{transform_indices = @transform_0, window_bounds = array<i64: 16, 128>}, {transform_indices = @transform_1, window_bounds = array<i64: 16, 128>}, {transform_indices = @transform_2, window_bounds = array<i64: 8, 128>}]} {
    %c0 = arith.constant 0 : index
    %c0_0 = arith.constant 0 : index
    %0 = vector.load %arg1[%c0, %c0_0] : memref<16x128xf32, #tpu.memory_space<vmem>>, vector<16x128xf32>
    %c0_1 = arith.constant 0 : index
    %c0_2 = arith.constant 0 : index
    %1 = vector.load %arg2[%c0_1, %c0_2] : memref<16x128xf32, #tpu.memory_space<vmem>>, vector<16x128xf32>
    %2 = arith.subf %0, %1 : vector<16x128xf32>
    %3 = math.absf %2 : vector<16x128xf32>
    %cst = arith.constant 1.000000e+00 : f32
    %4 = vector.broadcast %cst : f32 to vector<16x128xf32>
    %5 = arith.cmpf olt, %3, %4 : vector<16x128xf32>
    %cst_3 = arith.constant 5.000000e-01 : f32
    %6 = vector.broadcast %cst_3 : f32 to vector<16x128xf32>
    %7 = arith.mulf %6, %3 : vector<16x128xf32>
    %cst_4 = arith.constant 1.000000e+00 : f32
    %8 = vector.broadcast %cst_4 : f32 to vector<16x128xf32>
    %9 = arith.select %5, %7, %8 : vector<16x128xi1>, vector<16x128xf32>
    %10 = arith.mulf %3, %9 : vector<16x128xf32>
    %cst_5 = arith.constant 0.000000e+00 : f32
    %cst_6 = arith.constant 5.000000e-01 : f32
    %11 = vector.broadcast %cst_5 : f32 to vector<16x128xf32>
    %12 = vector.broadcast %cst_6 : f32 to vector<16x128xf32>
    %13 = arith.select %5, %11, %12 : vector<16x128xi1>, vector<16x128xf32>
    %14 = arith.subf %10, %13 : vector<16x128xf32>
    %15 = vector.shape_cast %14 : vector<16x128xf32> to vector<2x8x128xf32>
    %cst_7 = arith.constant dense<0.000000e+00> : vector<8x128xf32>
    %16 = vector.multi_reduction <add>, %15, %cst_7 [0] : vector<2x8x128xf32> to vector<8x128xf32>
    %c0_8 = arith.constant 0 : index
    %c0_9 = arith.constant 0 : index
    %17 = vector.load %arg3[%c0_8, %c0_9] : memref<8x128xf32, #tpu.memory_space<vmem>>, vector<8x128xf32>
    tpu.vector_store %arg3[%c0_8, %c0_9], %16 {strides = array<i32>} : memref<8x128xf32, #tpu.memory_space<vmem>>, vector<8x128xf32>,
    return
  }
  func.func @transform_0(%arg0: i32) -> (i32, i32) {
    %c0_i32 = arith.constant 0 : i32
    %c0_i32_0 = arith.constant 0 : i32
    return %arg0, %c0_i32 : i32, i32
  }
  func.func @transform_1(%arg0: i32) -> (i32, i32) {
    %c0_i32 = arith.constant 0 : i32
    %c0_i32_0 = arith.constant 0 : i32
    return %arg0, %c0_i32 : i32, i32
  }
  func.func @transform_2(%arg0: i32) -> (i32, i32) {
    %c0_i32 = arith.constant 0 : i32
    %c0_i32_0 = arith.constant 0 : i32
    return %arg0, %c0_i32 : i32, i32
  }
}

</mosaic_0001>

<llo_original>
// kernel: tpu_custom_call.1
$region0: #{tpu_custom_call.1}
  #allocation0 [shape = 'u32[]', space=smem, size = 0x4, offset = 0x4, fixed_abs, tag = 'smem constant byte address 0x4 - core index']
  #allocation1 [shape = 'u32[72,128]{1,0:T(1,128)}', space=vmem, size = 0x9000, scoped, tag = 'internal scratch']
  %s0 = inlined_call_operand.hbm [shape: f32[16,128], index: 0, kind: input, shape index: {}]
  %s1 = inlined_call_operand.hbm [shape: f32[16,128], index: 1, kind: input, shape index: {}]
  %s2 = inlined_call_operand.hbm [shape: f32[8,128], index: 2, kind: output, shape index: {}]
  %s3 = sld [smem:[#allocation0]]
  $region26: #{tpu_custom_call.1} parent=0
    _
  %s5 = ssub.s32 1, %s3
  %s6 = scalar_select 0, %s5, %s3
  $region1: #{tpu_custom_call.1} parent=0
    #allocation2 [shape = 'u8[8192]{0}', space=vmem, size = 0x2000, scoped, tag = 'input window, operand 0, single buffered']
    #allocation3 [shape = 's32[1]{0}', space=sflag, size = 0x4, scoped, tag = 'scoped memory for tpu_custom_call.1']
    #allocation4 [shape = 's32[1]{0}', space=sflag, size = 0x4, scoped, tag = 'scoped memory for tpu_custom_call.1']
    #allocation5 [shape = 'u8[8192]{0}', space=vmem, size = 0x2000, scoped, tag = 'input window, operand 1, single buffered']
    #allocation6 [shape = 's32[1]{0}', space=sflag, size = 0x4, scoped, tag = 'scoped memory for tpu_custom_call.1']
    #allocation7 [shape = 'u8[4096]{0}', space=vmem, size = 0x1000, scoped, tag = 'output window, operand 0, single buffered']
    %7 = vsyncpa [#allocation3], 0
    %8 = vsyncpa [#allocation6], 0
    %9 = vsyncpa [#allocation4], 0
    // Predicated region
    $region2: #{tpu_custom_call.1} parent=1 // pred_check
      _
    $region3: #{tpu_custom_call.1} parent=1 // pred_check_branch
      %11 = sbr.rel (0) target = $region5
    $region4: #{tpu_custom_call.1} parent=1 // pred_region
      %13 = vsyncadd [#allocation3], 0
      %s14 = sshll.u32 %s0, 4
      %s15 = int_to_ptr.hbm [resolvable:$true] %s14
      %s16 = sshll.u32 [#allocation2], 4
      %s17 = int_to_ptr.vmem [resolvable:$true] %s16
      %22 = dma.hbm_to_vmem [thread:$0]  %s15, 256, %s17, [#allocation3], 128, 128, 8
    $region5: #{tpu_custom_call.1} parent=1 // pred_fallthru
      _
    // Predicated region
    $region6: #{tpu_custom_call.1} parent=1 // pred_check
      _
    $region7: #{tpu_custom_call.1} parent=1 // pred_check_branch
      %24 = sbr.rel (0) target = $region9
    $region8: #{tpu_custom_call.1} parent=1 // pred_region
      %26 = vsyncadd [#allocation6], 0
      %s27 = sshll.u32 %s1, 4
      %s28 = int_to_ptr.hbm [resolvable:$true] %s27
      %s29 = sshll.u32 [#allocation5], 4
      %s30 = int_to_ptr.vmem [resolvable:$true] %s29
      %35 = dma.hbm_to_vmem [thread:$0]  %s28, 256, %s30, [#allocation6], 128, 128, 8
    $region9: #{tpu_custom_call.1} parent=1 // pred_fallthru
      _
    // Predicated region
    $region10: #{tpu_custom_call.1} parent=1 // pred_check
      _
    $region11: #{tpu_custom_call.1} parent=1 // pred_check_branch
      %37 = sbr.rel (0) target = $region13
    $region12: #{tpu_custom_call.1} parent=1 // pred_region
      %39 = dma.done [#allocation3], 256
    $region13: #{tpu_custom_call.1} parent=1 // pred_fallthru
      _
    // Predicated region
    $region14: #{tpu_custom_call.1} parent=1 // pred_check
      _
    $region15: #{tpu_custom_call.1} parent=1 // pred_check_branch
      %41 = sbr.rel (0) target = $region17
    $region16: #{tpu_custom_call.1} parent=1 // pred_region
      %43 = dma.done [#allocation6], 256
    $region17: #{tpu_custom_call.1} parent=1 // pred_fallthru
      _
    %v44 = vld [vmem:[#allocation2] sm:$0xff]
    %v45 = vld [vmem:[#allocation2 + $0x8] sm:$0xff]
    %v46 = vld [vmem:[#allocation5] sm:$0xff]
    %v47 = vld [vmem:[#allocation5 + $0x8] sm:$0xff]
    %v48 = vsub.f32 %v44, %v46
    %v49 = vsub.f32 %v45, %v47
    %v50 = vand.u32 2147483647, %v48
    %v51 = vand.u32 2147483647, %v49
    %vm52 = vcmp.lt.f32.partialorder %v50, 1.0
    %vm53 = vcmp.lt.f32.partialorder %v51, 1.0
    %v54 = vmul.f32 %v50, 0.5
    %v55 = vmul.f32 %v51, 0.5
    %v56 = vsel %vm52, %v54, 1.0
    %v57 = vsel %vm53, %v55, 1.0
    %v58 = vmul.f32 %v50, %v56
    %v59 = vmul.f32 %v51, %v57
    %v60 = vsel %vm52, 0.0, 0.5
    %v61 = vsel %vm53, 0.0, 0.5
    %v62 = vsub.f32 %v58, %v60
    %v63 = vsub.f32 %v59, %v61
    %v64 = vadd.f32 %v62, %v63
    %65 = vst [vmem:[#allocation7] sm:$0xff] %v64
    // Predicated region
    $region18: #{tpu_custom_call.1} parent=1 // pred_check
      _
    $region19: #{tpu_custom_call.1} parent=1 // pred_check_branch
      %67 = sbr.rel (0) target = $region21
    $region20: #{tpu_custom_call.1} parent=1 // pred_region
      %69 = vsyncadd [#allocation4], 0
      %s71 = sshll.u32 [#allocation7], 4
      %s72 = int_to_ptr.vmem [resolvable:$true] %s71
      %s73 = sshll.u32 %s2, 4
      %s74 = int_to_ptr.hbm [resolvable:$true] %s73
      %76 = dma.vmem_to_hbm [thread:$0]  %s72, 128, %s74, [#allocation4]
    $region21: #{tpu_custom_call.1} parent=1 // pred_fallthru
      _
    // Predicated region
    $region22: #{tpu_custom_call.1} parent=1 // pred_check
      _
    $region23: #{tpu_custom_call.1} parent=1 // pred_check_branch
      %78 = sbr.rel (0) target = $region25
    $region24: #{tpu_custom_call.1} parent=1 // pred_region
      %80 = dma.done [#allocation4], 128
    $region25: #{tpu_custom_call.1} parent=1 // pred_fallthru
      _
    %81 = vsyncpa [#allocation3], 1
    %82 = vsyncpa [#allocation6], 1
    %83 = vsyncpa [#allocation4], 1

</llo_original>
